<compile_context>
chip_gen: v7x
topology: tpu7x:2x2x1
jax: 0.10.0
libtpu: 0.0.40
codegen_flags: <defaults>
</compile_context>

<pallas_src>
import functools
import math

import jax
import jax.numpy as jnp
from jax.experimental import pallas as pl
from jax.experimental.pallas import tpu as pltpu

jax.config.update("jax_default_matmul_precision", "highest")

ATTEN_SIZE = 2
HIDDEN_SIZE = 64
OUTPUT_SIZE = 2
INPUT_SIZE = 32
BATCH = 2
SEQ = 8
NNEI = 2 * ATTEN_SIZE + 1      # neighbors per position (k = -2..+2)
OUT_PAD = 128                  # lane-padded output width (lane-dense store)


def _attn_kernel(x_ref, w_in_ref, b_in_ref, w_vo_ref, b_out_ref, out_ref, *,
                 seq, atten):
    """Single-program kernel.

    x_ref:     (B*S, Din)   flattened tokens; each batch owns `seq` rows
    w_in_ref:  (Din, H)     input projection
    b_in_ref:  (1, H)       input bias
    w_vo_ref:  (H, OUT_PAD) fused W_v @ W_out, zero-padded to 128 lanes
    b_out_ref: (1, OUT_PAD) output bias, zero-padded to 128 lanes
    out_ref:   (B*S, OUT_PAD)
    """
    x = x_ref[...]
    # input_layer: MatMul + bias + ReLU
    h = jnp.dot(x, w_in_ref[...], preferred_element_type=jnp.float32) + b_in_ref[...]
    h = jnp.maximum(h, 0.0)                                            # (B*S, H)

    # Fused value/output projection (W_v @ W_out, lane-padded to 128).
    g = jnp.dot(h, w_vo_ref[...], preferred_element_type=jnp.float32)  # (B*S, 128)

    n = g.shape[0]
    # Sequence position of every row; neighbor delta is valid iff the
    # (in-batch) position t+delta lies in [0, seq).  This simultaneously
    # reproduces the zero padding of the torch code and blocks cross-batch
    # leakage through the flattened row axis.
    pos = jax.lax.broadcasted_iota(jnp.int32, g.shape, 0) % seq

    acc = g + b_out_ref[...]                     # delta = 0 term + output bias
    for delta in range(-atten, atten + 1):
        if delta == 0:
            continue
        # row i picks up g[i + delta]  (in-register sublane rotate, XLU slot)
        shifted = pltpu.roll(g, shift=(-delta) % n, axis=0)
        valid = jnp.logical_and(pos + delta >= 0, pos + delta < seq)
        acc = acc + jnp.where(valid, shifted, 0.0)

    out_ref[...] = acc


@jax.jit
def ex_lrest_self_atten(x, params):
    B, S, Din = x.shape
    H = params["W_in"].shape[1]
    O = params["W_out"].shape[1]
    BS = B * S

    # Algebraic fusion (attention weights are provably all ones) + lane
    # padding so the kernel output store is unmasked / lane-dense.  Under jit
    # these fuse into the same XLA program as the pallas call.
    w_vo = jnp.dot(params["W_v"], params["W_out"])                     # (H, O)
    w_vo_pad = jnp.pad(w_vo, ((0, 0), (0, OUT_PAD - O)))               # (H, 128)
    b_out_pad = jnp.pad(params["b_out"], ((0, 0), (0, OUT_PAD - O)))   # (1, 128)

    vmem = pl.BlockSpec(memory_space=pltpu.MemorySpace.VMEM)
    out_slab = pl.pallas_call(
        functools.partial(_attn_kernel, seq=S, atten=ATTEN_SIZE),
        out_shape=jax.ShapeDtypeStruct((BS, OUT_PAD), jnp.float32),
        in_specs=[vmem, vmem, vmem, vmem, vmem],
        out_specs=vmem,
    )(x.reshape(BS, Din), params["W_in"], params["b_in"], w_vo_pad, b_out_pad)

    out = out_slab[:, :O].reshape(B, S, O)
    # torch.nn.Softmax(2) over the singleton dim of (B, S, 1, NNEI) == 1.0
    # exactly; the score path never influences `out`, so the weights are
    # emitted directly (same values, zero kernel work).
    atten = jnp.ones((B, S, 1, NNEI), jnp.float32)
    return out, atten


def init_params(key):
    ks = jax.random.split(key, 5)

    def xavier(k, shape):
        std = math.sqrt(2.0 / (shape[0] + shape[1]))
        return std * jax.random.normal(k, shape, jnp.float32)

    return dict(
        W_in=xavier(ks[0], (INPUT_SIZE, HIDDEN_SIZE)),
        b_in=jnp.zeros((1, HIDDEN_SIZE), jnp.float32),
        W_q=xavier(ks[1], (HIDDEN_SIZE, HIDDEN_SIZE)),
        W_k=xavier(ks[2], (HIDDEN_SIZE, HIDDEN_SIZE)),
        W_v=xavier(ks[3], (HIDDEN_SIZE, HIDDEN_SIZE)),
        W_out=xavier(ks[4], (HIDDEN_SIZE, OUTPUT_SIZE)),
        b_out=jnp.zeros((1, OUTPUT_SIZE), jnp.float32),
    )


def reference(x, p):
    """Pure-JAX transcription of the full (unfused) PyTorch forward pass."""
    A = ATTEN_SIZE
    h = jax.nn.relu(x @ p["W_in"] + p["b_in"][None])                    # (B,S,H)
    padded = jnp.pad(h, ((0, 0), (A, A), (0, 0)))
    nei = jnp.stack([jnp.roll(padded, k, axis=1) for k in range(-A, A + 1)], axis=2)
    nei = nei[:, A:-A]                                                  # (B,S,NNEI,H)
    q = h @ p["W_q"]
    keys = nei @ p["W_k"]
    vals = nei @ p["W_v"]
    d = jnp.einsum("bsh,bsjh->bsj", q, keys)[:, :, None, :] / math.sqrt(float(HIDDEN_SIZE))
    w = jax.nn.softmax(d, axis=2)                                       # singleton axis -> ones
    att = jnp.matmul(w, vals).squeeze(2)                                # (B,S,H)
    out = att @ p["W_out"] + p["b_out"][None]
    return out, w


if __name__ == "__main__":
    key = jax.random.PRNGKey(0)
    kx, kp = jax.random.split(key)
    x = jax.random.normal(kx, (BATCH, SEQ, INPUT_SIZE), jnp.float32)
    params = init_params(kp)

    out, atten = ex_lrest_self_atten(x, params)
    out = jax.block_until_ready(out)
    atten = jax.block_until_ready(atten)

    ref_out, ref_w = reference(x, params)
    assert out.shape == (BATCH, SEQ, OUTPUT_SIZE)
    assert atten.shape == (BATCH, SEQ, 1, NNEI)
    assert jnp.allclose(out, ref_out, atol=1e-3, rtol=1e-3), \
        float(jnp.max(jnp.abs(out - ref_out)))
    assert jnp.allclose(atten, ref_w, atol=1e-6, rtol=1e-6)

    print("KERNEL_OK")
</pallas_src>

<mosaic_0001>
module attributes {stable_mosaic.version = 11 : i64} {
  func.func @_attn_kernel(%arg0: memref<16x32xf32, #tpu.memory_space<vmem>>, %arg1: memref<32x64xf32, #tpu.memory_space<vmem>>, %arg2: memref<1x64xf32, #tpu.memory_space<vmem>>, %arg3: memref<64x128xf32, #tpu.memory_space<vmem>>, %arg4: memref<1x128xf32, #tpu.memory_space<vmem>>, %arg5: memref<16x128xf32, #tpu.memory_space<vmem>>) attributes {dimension_semantics = [], scalar_prefetch = 0 : i64, scratch_operands = 0 : i64, tpu.core_type = #tpu.core_type<tc>} {
    %c0 = arith.constant 0 : index
    %c0_0 = arith.constant 0 : index
    %0 = vector.load %arg0[%c0, %c0_0] : memref<16x32xf32, #tpu.memory_space<vmem>>, vector<16x32xf32>
    %c0_1 = arith.constant 0 : index
    %c0_2 = arith.constant 0 : index
    %1 = vector.load %arg1[%c0_1, %c0_2] : memref<32x64xf32, #tpu.memory_space<vmem>>, vector<32x64xf32>
    %cst = arith.constant dense<0.000000e+00> : vector<16x64xf32>
    %2 = tpu.matmul %0, %1, %cst {dimension_numbers = #tpu.dot_dimension_numbers<[1], [0], [0], [1], [0, 0, 1, 1], [], []>, precision = #tpu.contract_precision<fp32>} : vector<16x32xf32>, vector<32x64xf32>, vector<16x64xf32> -> vector<16x64xf32>
    %c0_3 = arith.constant 0 : index
    %c0_4 = arith.constant 0 : index
    %3 = vector.load %arg2[%c0_3, %c0_4] : memref<1x64xf32, #tpu.memory_space<vmem>>, vector<1x64xf32>
    %4 = vector.broadcast %3 : vector<1x64xf32> to vector<16x64xf32>
    %5 = arith.addf %2, %4 : vector<16x64xf32>
    %cst_5 = arith.constant 0.000000e+00 : f32
    %6 = vector.broadcast %cst_5 : f32 to vector<16x64xf32>
    %7 = arith.maximumf %5, %6 : vector<16x64xf32>
    %c0_6 = arith.constant 0 : index
    %c0_7 = arith.constant 0 : index
    %8 = vector.load %arg3[%c0_6, %c0_7] : memref<64x128xf32, #tpu.memory_space<vmem>>, vector<64x128xf32>
    %cst_8 = arith.constant dense<0.000000e+00> : vector<16x128xf32>
    %9 = tpu.matmul %7, %8, %cst_8 {dimension_numbers = #tpu.dot_dimension_numbers<[1], [0], [0], [1], [0, 0, 1, 1], [], []>, precision = #tpu.contract_precision<fp32>} : vector<16x64xf32>, vector<64x128xf32>, vector<16x128xf32> -> vector<16x128xf32>
    %10 = tpu.iota {dimensions = array<i32: 0>} : vector<16x128xi32>
    %c8_i32 = arith.constant 8 : i32
    %c0_i32 = arith.constant 0 : i32
    %11 = arith.cmpi eq, %c8_i32, %c0_i32 : i32
    %c1_i32 = arith.constant 1 : i32
    %12 = arith.select %11, %c1_i32, %c8_i32 : i32
    %13 = vector.broadcast %12 : i32 to vector<16x128xi32>
    %14 = arith.remsi %10, %13 : vector<16x128xi32>
    %c0_i32_9 = arith.constant 0 : i32
    %15 = vector.broadcast %c0_i32_9 : i32 to vector<16x128xi32>
    %16 = arith.cmpi ne, %14, %15 : vector<16x128xi32>
    %c0_i32_10 = arith.constant 0 : i32
    %17 = vector.broadcast %c0_i32_10 : i32 to vector<16x128xi32>
    %18 = arith.cmpi slt, %14, %17 : vector<16x128xi32>
    %c0_i32_11 = arith.constant 0 : i32
    %19 = arith.cmpi slt, %12, %c0_i32_11 : i32
    %20 = vector.broadcast %19 : i1 to vector<16x128xi1>
    %21 = vector.broadcast %20 : vector<16x128xi1> to vector<16x128xi1>
    %22 = arith.xori %18, %21 : vector<16x128xi1>
    %23 = arith.andi %22, %16 : vector<16x128xi1>
    %24 = vector.broadcast %12 : i32 to vector<16x128xi32>
    %25 = arith.addi %14, %24 : vector<16x128xi32>
    %26 = arith.select %23, %25, %14 : vector<16x128xi1>, vector<16x128xi32>
    %c0_12 = arith.constant 0 : index
    %c0_13 = arith.constant 0 : index
    %27 = vector.load %arg4[%c0_12, %c0_13] : memref<1x128xf32, #tpu.memory_space<vmem>>, vector<1x128xf32>
    %28 = vector.broadcast %27 : vector<1x128xf32> to vector<16x128xf32>
    %29 = arith.addf %9, %28 : vector<16x128xf32>
    %c2_i32 = arith.constant 2 : i32
    %30 = tpu.dynamic_rotate %9 by %c2_i32 dim 0 : vector<16x128xf32>, i32 -> vector<16x128xf32>
    %c-2_i32 = arith.constant -2 : i32
    %31 = vector.broadcast %c-2_i32 : i32 to vector<16x128xi32>
    %32 = arith.addi %26, %31 : vector<16x128xi32>
    %c0_i32_14 = arith.constant 0 : i32
    %33 = vector.broadcast %c0_i32_14 : i32 to vector<16x128xi32>
    %34 = arith.cmpi sge, %32, %33 : vector<16x128xi32>
    %c-2_i32_15 = arith.constant -2 : i32
    %35 = vector.broadcast %c-2_i32_15 : i32 to vector<16x128xi32>
    %36 = arith.addi %26, %35 : vector<16x128xi32>
    %c8_i32_16 = arith.constant 8 : i32
    %37 = vector.broadcast %c8_i32_16 : i32 to vector<16x128xi32>
    %38 = arith.cmpi slt, %36, %37 : vector<16x128xi32>
    %39 = arith.andi %34, %38 : vector<16x128xi1>
    %cst_17 = arith.constant 0.000000e+00 : f32
    %40 = vector.broadcast %cst_17 : f32 to vector<16x128xf32>
    %41 = arith.select %39, %30, %40 : vector<16x128xi1>, vector<16x128xf32>
    %42 = arith.addf %29, %41 : vector<16x128xf32>
    %c1_i32_18 = arith.constant 1 : i32
    %43 = tpu.dynamic_rotate %9 by %c1_i32_18 dim 0 : vector<16x128xf32>, i32 -> vector<16x128xf32>
    %c-1_i32 = arith.constant -1 : i32
    %44 = vector.broadcast %c-1_i32 : i32 to vector<16x128xi32>
    %45 = arith.addi %26, %44 : vector<16x128xi32>
    %c0_i32_19 = arith.constant 0 : i32
    %46 = vector.broadcast %c0_i32_19 : i32 to vector<16x128xi32>
    %47 = arith.cmpi sge, %45, %46 : vector<16x128xi32>
    %c-1_i32_20 = arith.constant -1 : i32
    %48 = vector.broadcast %c-1_i32_20 : i32 to vector<16x128xi32>
    %49 = arith.addi %26, %48 : vector<16x128xi32>
    %c8_i32_21 = arith.constant 8 : i32
    %50 = vector.broadcast %c8_i32_21 : i32 to vector<16x128xi32>
    %51 = arith.cmpi slt, %49, %50 : vector<16x128xi32>
    %52 = arith.andi %47, %51 : vector<16x128xi1>
    %cst_22 = arith.constant 0.000000e+00 : f32
    %53 = vector.broadcast %cst_22 : f32 to vector<16x128xf32>
    %54 = arith.select %52, %43, %53 : vector<16x128xi1>, vector<16x128xf32>
    %55 = arith.addf %42, %54 : vector<16x128xf32>
    %c15_i32 = arith.constant 15 : i32
    %56 = tpu.dynamic_rotate %9 by %c15_i32 dim 0 : vector<16x128xf32>, i32 -> vector<16x128xf32>
    %c1_i32_23 = arith.constant 1 : i32
    %57 = vector.broadcast %c1_i32_23 : i32 to vector<16x128xi32>
    %58 = arith.addi %26, %57 : vector<16x128xi32>
    %c0_i32_24 = arith.constant 0 : i32
    %59 = vector.broadcast %c0_i32_24 : i32 to vector<16x128xi32>
    %60 = arith.cmpi sge, %58, %59 : vector<16x128xi32>
    %c1_i32_25 = arith.constant 1 : i32
    %61 = vector.broadcast %c1_i32_25 : i32 to vector<16x128xi32>
    %62 = arith.addi %26, %61 : vector<16x128xi32>
    %c8_i32_26 = arith.constant 8 : i32
    %63 = vector.broadcast %c8_i32_26 : i32 to vector<16x128xi32>
    %64 = arith.cmpi slt, %62, %63 : vector<16x128xi32>
    %65 = arith.andi %60, %64 : vector<16x128xi1>
    %cst_27 = arith.constant 0.000000e+00 : f32
    %66 = vector.broadcast %cst_27 : f32 to vector<16x128xf32>
    %67 = arith.select %65, %56, %66 : vector<16x128xi1>, vector<16x128xf32>
    %68 = arith.addf %55, %67 : vector<16x128xf32>
    %c14_i32 = arith.constant 14 : i32
    %69 = tpu.dynamic_rotate %9 by %c14_i32 dim 0 : vector<16x128xf32>, i32 -> vector<16x128xf32>
    %c2_i32_28 = arith.constant 2 : i32
    %70 = vector.broadcast %c2_i32_28 : i32 to vector<16x128xi32>
    %71 = arith.addi %26, %70 : vector<16x128xi32>
    %c0_i32_29 = arith.constant 0 : i32
    %72 = vector.broadcast %c0_i32_29 : i32 to vector<16x128xi32>
    %73 = arith.cmpi sge, %71, %72 : vector<16x128xi32>
    %c2_i32_30 = arith.constant 2 : i32
    %74 = vector.broadcast %c2_i32_30 : i32 to vector<16x128xi32>
    %75 = arith.addi %26, %74 : vector<16x128xi32>
    %c8_i32_31 = arith.constant 8 : i32
    %76 = vector.broadcast %c8_i32_31 : i32 to vector<16x128xi32>
    %77 = arith.cmpi slt, %75, %76 : vector<16x128xi32>
    %78 = arith.andi %73, %77 : vector<16x128xi1>
    %cst_32 = arith.constant 0.000000e+00 : f32
    %79 = vector.broadcast %cst_32 : f32 to vector<16x128xf32>
    %80 = arith.select %78, %69, %79 : vector<16x128xi1>, vector<16x128xf32>
    %81 = arith.addf %68, %80 : vector<16x128xf32>
    %c0_33 = arith.constant 0 : index
    %c0_34 = arith.constant 0 : index
    %82 = vector.load %arg5[%c0_33, %c0_34] : memref<16x128xf32, #tpu.memory_space<vmem>>, vector<16x128xf32>
    tpu.vector_store %arg5[%c0_33, %c0_34], %81 {strides = array<i32>} : memref<16x128xf32, #tpu.memory_space<vmem>>, vector<16x128xf32>,
    return
  }
}

</mosaic_0001>

<llo_original>
// kernel: ex_lrest_self_atten.1
$region0: #{ex_lrest_self_atten.1}
  #allocation0 [shape = 'u32[]', space=smem, size = 0x4, offset = 0x4, fixed_abs, tag = 'smem constant byte address 0x4 - core index']
  #allocation1 [shape = 'u32[144,128]{1,0:T(1,128)}', space=vmem, size = 0x12000, scoped, tag = 'internal scratch']
  %s0 = inlined_call_operand.vmem [shape: f32[16,32], index: 0, kind: input, shape index: {}]
  %s1 = inlined_call_operand.vmem [shape: f32[32,64], index: 1, kind: input, shape index: {}]
  %s2 = inlined_call_operand.vmem [shape: f32[1,64], index: 2, kind: input, shape index: {}]
  %s3 = inlined_call_operand.vmem [shape: f32[64,128], index: 3, kind: input, shape index: {}]
  %s4 = inlined_call_operand.vmem [shape: f32[1,128], index: 4, kind: input, shape index: {}]
  %s5 = inlined_call_operand.vmem [shape: f32[16,128], index: 5, kind: output, shape index: {}]
  %s6 = sld [smem:[#allocation0]]
  $region30: #{ex_lrest_self_atten.1} parent=0
    _
  %s8 = ssub.s32 1, %s6
  %s9 = scalar_select 0, %s8, %s6
  // Predicated region
  $region2: #{ex_lrest_self_atten.1} parent=0 // pred_check
    _
  $region3: #{ex_lrest_self_atten.1} parent=0 // pred_check_branch
    %11 = sbr.rel (0) target = $region5
  $region4: #{ex_lrest_self_atten.1} parent=0 // pred_region
    _
  $region5: #{ex_lrest_self_atten.1} parent=0 // pred_fallthru
    _
  // Predicated region
  $region6: #{ex_lrest_self_atten.1} parent=0 // pred_check
    _
  $region7: #{ex_lrest_self_atten.1} parent=0 // pred_check_branch
    %13 = sbr.rel (0) target = $region9
  $region8: #{ex_lrest_self_atten.1} parent=0 // pred_region
    _
  $region9: #{ex_lrest_self_atten.1} parent=0 // pred_fallthru
    _
  // Predicated region
  $region10: #{ex_lrest_self_atten.1} parent=0 // pred_check
    _
  $region11: #{ex_lrest_self_atten.1} parent=0 // pred_check_branch
    %15 = sbr.rel (0) target = $region13
  $region12: #{ex_lrest_self_atten.1} parent=0 // pred_region
    _
  $region13: #{ex_lrest_self_atten.1} parent=0 // pred_fallthru
    _
  // Predicated region
  $region14: #{ex_lrest_self_atten.1} parent=0 // pred_check
    _
  $region15: #{ex_lrest_self_atten.1} parent=0 // pred_check_branch
    %17 = sbr.rel (0) target = $region17
  $region16: #{ex_lrest_self_atten.1} parent=0 // pred_region
    _
  $region17: #{ex_lrest_self_atten.1} parent=0 // pred_fallthru
    _
  // Predicated region
  $region18: #{ex_lrest_self_atten.1} parent=0 // pred_check
    _
  $region19: #{ex_lrest_self_atten.1} parent=0 // pred_check_branch
    %19 = sbr.rel (0) target = $region21
  $region20: #{ex_lrest_self_atten.1} parent=0 // pred_region
    _
  $region21: #{ex_lrest_self_atten.1} parent=0 // pred_fallthru
    _
  %v20 = vld [vmem:[%s0] sm:$0xff]
  %v21 = vld [vmem:[%s0 + $0x8] sm:$0xff]
  %v22 = vld [vmem:[%s1] sm:$0xff]
  %v23 = vld [vmem:[%s1 + $0x8] sm:$0xff]
  %v24 = vld [vmem:[%s1 + $0x10] sm:$0xff]
  %v25 = vld [vmem:[%s1 + $0x18] sm:$0xff]
  %v26 = vld [vmem:[%s2] sm:$0x1]
  %v28 = vlaneseq
  %v29 = vshrl.u32 %v28, 7
  %v30 = vsub.s32 0, %v29
  %v31 = vrot.slane %v26, %v30
  %vm33 = vcmask 261120
  %v35 = vsel %vm33, %v20, 0
  %v38 = vsel %vm33, %v21, 0
  %40 = vmatprep.subr.mxu0 0.0
  %v41 = vand.u32 %v22, 4294901760
  %42 = vmatpush1.msra.mxu0 %v41
  %43 = vmatprep.subr.mxu0 0.0
  %v44 = vand.u32 %v23, 4294901760
  %45 = vmatpush1.msra.mxu0 %v44
  %46 = vmatprep.subr.mxu0 0.0
  %v47 = vand.u32 %v24, 4294901760
  %48 = vmatpush1.msra.mxu0 %v47
  %49 = vmatprep.subr.mxu0 0.0
  %v50 = vand.u32 %v25, 4294901760
  %51 = vmatpush1.msra.mxu0 %v50
  %52 = vmatprep.subr.mxu0 0.0
  %53 = vmatpush1.msra.mxu0 0.0
  %54 = vmatprep.subr.mxu0 0.0
  %55 = vmatpush1.msra.mxu0 0.0
  %56 = vmatprep.subr.mxu0 0.0
  %57 = vmatpush1.msra.mxu0 0.0
  %58 = vmatprep.subr.mxu0 0.0
  %59 = vmatpush1.msra.mxu0 0.0
  %60 = vmatprep.subr.mxu0 0.0
  %61 = vmatpush1.msra.mxu0 0.0
  %62 = vmatprep.subr.mxu0 0.0
  %63 = vmatpush1.msra.mxu0 0.0
  %64 = vmatprep.subr.mxu0 0.0
  %65 = vmatpush1.msra.mxu0 0.0
  %66 = vmatprep.subr.mxu0 0.0
  %67 = vmatpush1.msra.mxu0 0.0
  %68 = vmatprep.subr.mxu0 0.0
  %69 = vmatpush1.msra.mxu0 0.0
  %70 = vmatprep.subr.mxu0 0.0
  %71 = vmatpush1.msra.mxu0 0.0
  %72 = vmatprep.subr.mxu0 0.0
  %73 = vmatpush1.msra.mxu0 0.0
  %74 = vmatprep.subr.mxu0 0.0
  %75 = vmatpush1.msra.mxu0 0.0
  %76 = vmatprep.subr.mxu0 0.0
  %77 = vmatpush1.msra.mxu0 0.0
  %78 = vmatprep.subr.mxu0 0.0
  %79 = vmatpush1.msra.mxu0 0.0
  %80 = vmatprep.subr.mxu0 0.0
  %81 = vmatpush1.msra.mxu0 0.0
  %82 = vmatprep.subr.mxu0 0.0
  %83 = vmatpush1.msra.mxu0 0.0
  %84 = vmatprep.subr.mxu0 0.0
  %85 = vmatpush1.msra.mxu0 0.0
  %86 = vmatprep.subr.mxu0 0.0
  %87 = vmatpush1.msra.mxu0 0.0
  %88 = vmatprep.subr.mxu0 0.0
  %89 = vmatpush1.msra.mxu0 0.0
  %90 = vmatprep.subr.mxu0 0.0
  %91 = vmatpush1.msra.mxu0 0.0
  %92 = vmatprep.subr.mxu0 0.0
  %93 = vmatpush1.msra.mxu0 0.0
  %94 = vmatprep.subr.mxu0 0.0
  %95 = vmatpush1.msra.mxu0 0.0
  %96 = vmatprep.subr.mxu0 0.0
  %97 = vmatpush1.msra.mxu0 0.0
  %98 = vmatprep.subr.mxu0 0.0
  %99 = vmatpush1.msra.mxu0 0.0
  %100 = vmatprep.subr.mxu0 0.0
  %101 = vmatpush1.msra.mxu0 0.0
  %102 = vmatprep.subr.mxu0 0.0
  %103 = vmatpush1.msra.mxu0 0.0
  %104 = vmatprep.subr.mxu0 0.0
  %105 = vmatpush1.msra.mxu0 0.0
  %106 = vmatprep.subr.mxu0 0.0
  %107 = vmatpush1.msra.mxu0 0.0
  %108 = vmatprep.mubr.f32.mxu0 0.0
  %v109 = vand.u32 %v35, 4294901760
  %v110 = vsub.f32 %v35, %v109
  %v111 = vand.u32 %v110, 4294901760
  %v112 = vsub.f32 %v110, %v111
  %v113 = vand.u32 %v112, 4294901760
  %114 = vmatmul.mubr.f32.gmra.mrb[0].mxu0 %v113
  %v115 = vpop.f32.mrb[0].mxu0
  %v116 = vadd.f32 %v31, %v115
  %v117 = vpop.f32.mrb[0].mxu0
  %118 = vmatprep.mubr.f32.mxu0 0.0
  %v119 = vand.u32 %v38, 4294901760
  %v120 = vsub.f32 %v38, %v119
  %v121 = vand.u32 %v120, 4294901760
  %v122 = vsub.f32 %v120, %v121
  %v123 = vand.u32 %v122, 4294901760
  %124 = vmatmul.mubr.f32.gmra.mrb[0].mxu0 %v123
  %v125 = vpop.f32.mrb[0].mxu0
  %v126 = vadd.f32 %v31, %v125
  %v127 = vpop.f32.mrb[0].mxu0
  %128 = vdwg.mxu0
  %129 = vmatprep.subr.mxu0 0.0
  %v130 = vand.u32 %v22, 4294901760
  %v131 = vsub.f32 %v22, %v130
  %v132 = vand.u32 %v131, 4294901760
  %v133 = vsub.f32 %v131, %v132
  %v134 = vand.u32 %v133, 4294901760
  %135 = vmatpush1.msra.mxu0 %v134
  %136 = vmatprep.subr.mxu0 0.0
  %v137 = vand.u32 %v23, 4294901760
  %v138 = vsub.f32 %v23, %v137
  %v139 = vand.u32 %v138, 4294901760
  %v140 = vsub.f32 %v138, %v139
  %v141 = vand.u32 %v140, 4294901760
  %142 = vmatpush1.msra.mxu0 %v141
  %143 = vmatprep.subr.mxu0 0.0
  %v144 = vand.u32 %v24, 4294901760
  %v145 = vsub.f32 %v24, %v144
  %v146 = vand.u32 %v145, 4294901760
  %v147 = vsub.f32 %v145, %v146
  %v148 = vand.u32 %v147, 4294901760
  %149 = vmatpush1.msra.mxu0 %v148
  %150 = vmatprep.subr.mxu0 0.0
  %v151 = vand.u32 %v25, 4294901760
  %v152 = vsub.f32 %v25, %v151
  %v153 = vand.u32 %v152, 4294901760
  %v154 = vsub.f32 %v152, %v153
  %v155 = vand.u32 %v154, 4294901760
  %156 = vmatpush1.msra.mxu0 %v155
  %157 = vmatprep.subr.mxu0 0.0
  %158 = vmatpush1.msra.mxu0 0.0
  %159 = vmatprep.subr.mxu0 0.0
  %160 = vmatpush1.msra.mxu0 0.0
  %161 = vmatprep.subr.mxu0 0.0
  %162 = vmatpush1.msra.mxu0 0.0
  %163 = vmatprep.subr.mxu0 0.0
  %164 = vmatpush1.msra.mxu0 0.0
  %165 = vmatprep.subr.mxu0 0.0
  %166 = vmatpush1.msra.mxu0 0.0
  %167 = vmatprep.subr.mxu0 0.0
  %168 = vmatpush1.msra.mxu0 0.0
  %169 = vmatprep.subr.mxu0 0.0
  %170 = vmatpush1.msra.mxu0 0.0
  %171 = vmatprep.subr.mxu0 0.0
  %172 = vmatpush1.msra.mxu0 0.0
  %173 = vmatprep.subr.mxu0 0.0
  %174 = vmatpush1.msra.mxu0 0.0
  %175 = vmatprep.subr.mxu0 0.0
  %176 = vmatpush1.msra.mxu0 0.0
  %177 = vmatprep.subr.mxu0 0.0
  %178 = vmatpush1.msra.mxu0 0.0
  %179 = vmatprep.subr.mxu0 0.0
  %180 = vmatpush1.msra.mxu0 0.0
  %181 = vmatprep.subr.mxu0 0.0
  %182 = vmatpush1.msra.mxu0 0.0
  %183 = vmatprep.subr.mxu0 0.0
  %184 = vmatpush1.msra.mxu0 0.0
  %185 = vmatprep.subr.mxu0 0.0
  %186 = vmatpush1.msra.mxu0 0.0
  %187 = vmatprep.subr.mxu0 0.0
  %188 = vmatpush1.msra.mxu0 0.0
  %189 = vmatprep.subr.mxu0 0.0
  %190 = vmatpush1.msra.mxu0 0.0
  %191 = vmatprep.subr.mxu0 0.0
  %192 = vmatpush1.msra.mxu0 0.0
  %193 = vmatprep.subr.mxu0 0.0
  %194 = vmatpush1.msra.mxu0 0.0
  %195 = vmatprep.subr.mxu0 0.0
  %196 = vmatpush1.msra.mxu0 0.0
  %197 = vmatprep.subr.mxu0 0.0
  %198 = vmatpush1.msra.mxu0 0.0
  %199 = vmatprep.subr.mxu0 0.0
  %200 = vmatpush1.msra.mxu0 0.0
  %201 = vmatprep.subr.mxu0 0.0
  %202 = vmatpush1.msra.mxu0 0.0
  %203 = vmatprep.subr.mxu0 0.0
  %204 = vmatpush1.msra.mxu0 0.0
  %205 = vmatprep.subr.mxu0 0.0
  %206 = vmatpush1.msra.mxu0 0.0
  %207 = vmatprep.subr.mxu0 0.0
  %208 = vmatpush1.msra.mxu0 0.0
  %209 = vmatprep.subr.mxu0 0.0
  %210 = vmatpush1.msra.mxu0 0.0
  %211 = vmatprep.subr.mxu0 0.0
  %212 = vmatpush1.msra.mxu0 0.0
  %213 = vmatprep.mubr.f32.mxu0 0.0
  %v214 = vand.u32 %v35, 4294901760
  %215 = vmatmul.mubr.f32.gmra.mrb[0].mxu0 %v214
  %v216 = vpop.f32.mrb[0].mxu0
  %v217 = vadd.f32 %v116, %v216
  %v218 = vpop.f32.mrb[0].mxu0
  %219 = vmatprep.mubr.f32.mxu0 0.0
  %v220 = vand.u32 %v38, 4294901760
  %221 = vmatmul.mubr.f32.gmra.mrb[0].mxu0 %v220
  %v222 = vpop.f32.mrb[0].mxu0
  %v223 = vadd.f32 %v126, %v222
  %v224 = vpop.f32.mrb[0].mxu0
  %225 = vdwg.mxu0
  %226 = vmatprep.subr.mxu0 0.0
  %v227 = vand.u32 %v22, 4294901760
  %v228 = vsub.f32 %v22, %v227
  %229 = vmatpush1.msra.mxu0 %v228
  %230 = vmatprep.subr.mxu0 0.0
  %v231 = vand.u32 %v23, 4294901760
  %v232 = vsub.f32 %v23, %v231
  %233 = vmatpush1.msra.mxu0 %v232
  %234 = vmatprep.subr.mxu0 0.0
  %v235 = vand.u32 %v24, 4294901760
  %v236 = vsub.f32 %v24, %v235
  %237 = vmatpush1.msra.mxu0 %v236
  %238 = vmatprep.subr.mxu0 0.0
  %v239 = vand.u32 %v25, 4294901760
  %v240 = vsub.f32 %v25, %v239
  %241 = vmatpush1.msra.mxu0 %v240
  %242 = vmatprep.subr.mxu0 0.0
  %243 = vmatpush1.msra.mxu0 0.0
  %244 = vmatprep.subr.mxu0 0.0
  %245 = vmatpush1.msra.mxu0 0.0
  %246 = vmatprep.subr.mxu0 0.0
  %247 = vmatpush1.msra.mxu0 0.0
  %248 = vmatprep.subr.mxu0 0.0
  %249 = vmatpush1.msra.mxu0 0.0
  %250 = vmatprep.subr.mxu0 0.0
  %251 = vmatpush1.msra.mxu0 0.0
  %252 = vmatprep.subr.mxu0 0.0
  %253 = vmatpush1.msra.mxu0 0.0
  %254 = vmatprep.subr.mxu0 0.0
  %255 = vmatpush1.msra.mxu0 0.0
  %256 = vmatprep.subr.mxu0 0.0
  %257 = vmatpush1.msra.mxu0 0.0
  %258 = vmatprep.subr.mxu0 0.0
  %259 = vmatpush1.msra.mxu0 0.0
  %260 = vmatprep.subr.mxu0 0.0
  %261 = vmatpush1.msra.mxu0 0.0
  %262 = vmatprep.subr.mxu0 0.0
  %263 = vmatpush1.msra.mxu0 0.0
  %264 = vmatprep.subr.mxu0 0.0
  %265 = vmatpush1.msra.mxu0 0.0
  %266 = vmatprep.subr.mxu0 0.0
  %267 = vmatpush1.msra.mxu0 0.0
  %268 = vmatprep.subr.mxu0 0.0
  %269 = vmatpush1.msra.mxu0 0.0
  %270 = vmatprep.subr.mxu0 0.0
  %271 = vmatpush1.msra.mxu0 0.0
  %272 = vmatprep.subr.mxu0 0.0
  %273 = vmatpush1.msra.mxu0 0.0
  %274 = vmatprep.subr.mxu0 0.0
  %275 = vmatpush1.msra.mxu0 0.0
  %276 = vmatprep.subr.mxu0 0.0
  %277 = vmatpush1.msra.mxu0 0.0
  %278 = vmatprep.subr.mxu0 0.0
  %279 = vmatpush1.msra.mxu0 0.0
  %280 = vmatprep.subr.mxu0 0.0
  %281 = vmatpush1.msra.mxu0 0.0
  %282 = vmatprep.subr.mxu0 0.0
  %283 = vmatpush1.msra.mxu0 0.0
  %284 = vmatprep.subr.mxu0 0.0
  %285 = vmatpush1.msra.mxu0 0.0
  %286 = vmatprep.subr.mxu0 0.0
  %287 = vmatpush1.msra.mxu0 0.0
  %288 = vmatprep.subr.mxu0 0.0
  %289 = vmatpush1.msra.mxu0 0.0
  %290 = vmatprep.subr.mxu0 0.0
  %291 = vmatpush1.msra.mxu0 0.0
  %292 = vmatprep.subr.mxu0 0.0
  %293 = vmatpush1.msra.mxu0 0.0
  %294 = vmatprep.subr.mxu0 0.0
  %295 = vmatpush1.msra.mxu0 0.0
  %296 = vmatprep.subr.mxu0 0.0
  %297 = vmatpush1.msra.mxu0 0.0
  %298 = vmatprep.mubr.f32.mxu0 0.0
  %v299 = vand.u32 %v35, 4294901760
  %v300 = vsub.f32 %v35, %v299
  %301 = vmatmul.mubr.f32.gmra.mrb[0].mxu0 %v300
  %v302 = vpop.f32.mrb[0].mxu0
  %v303 = vadd.f32 %v217, %v302
  %v304 = vpop.f32.mrb[0].mxu0
  %305 = vmatprep.mubr.f32.mxu0 0.0
  %v306 = vand.u32 %v38, 4294901760
  %v307 = vsub.f32 %v38, %v306
  %308 = vmatmul.mubr.f32.gmra.mrb[0].mxu0 %v307
  %v309 = vpop.f32.mrb[0].mxu0
  %v310 = vadd.f32 %v223, %v309
  %v311 = vpop.f32.mrb[0].mxu0
  %312 = vdwg.mxu0
  %313 = vmatprep.subr.mxu0 0.0
  %v314 = vand.u32 %v22, 4294901760
  %315 = vmatpush1.msra.mxu0 %v314
  %316 = vmatprep.subr.mxu0 0.0
  %v317 = vand.u32 %v23, 4294901760
  %318 = vmatpush1.msra.mxu0 %v317
  %319 = vmatprep.subr.mxu0 0.0
  %v320 = vand.u32 %v24, 4294901760
  %321 = vmatpush1.msra.mxu0 %v320
  %322 = vmatprep.subr.mxu0 0.0
  %v323 = vand.u32 %v25, 4294901760
  %324 = vmatpush1.msra.mxu0 %v323
  %325 = vmatprep.subr.mxu0 0.0
  %326 = vmatpush1.msra.mxu0 0.0
  %327 = vmatprep.subr.mxu0 0.0
  %328 = vmatpush1.msra.mxu0 0.0
  %329 = vmatprep.subr.mxu0 0.0
  %330 = vmatpush1.msra.mxu0 0.0
  %331 = vmatprep.subr.mxu0 0.0
  %332 = vmatpush1.msra.mxu0 0.0
  %333 = vmatprep.subr.mxu0 0.0
  %334 = vmatpush1.msra.mxu0 0.0
  %335 = vmatprep.subr.mxu0 0.0
  %336 = vmatpush1.msra.mxu0 0.0
  %337 = vmatprep.subr.mxu0 0.0
  %338 = vmatpush1.msra.mxu0 0.0
  %339 = vmatprep.subr.mxu0 0.0
  %340 = vmatpush1.msra.mxu0 0.0
  %341 = vmatprep.subr.mxu0 0.0
  %342 = vmatpush1.msra.mxu0 0.0
  %343 = vmatprep.subr.mxu0 0.0
  %344 = vmatpush1.msra.mxu0 0.0
  %345 = vmatprep.subr.mxu0 0.0
  %346 = vmatpush1.msra.mxu0 0.0
  %347 = vmatprep.subr.mxu0 0.0
  %348 = vmatpush1.msra.mxu0 0.0
  %349 = vmatprep.subr.mxu0 0.0
  %350 = vmatpush1.msra.mxu0 0.0
  %351 = vmatprep.subr.mxu0 0.0
  %352 = vmatpush1.msra.mxu0 0.0
  %353 = vmatprep.subr.mxu0 0.0
  %354 = vmatpush1.msra.mxu0 0.0
  %355 = vmatprep.subr.mxu0 0.0
  %356 = vmatpush1.msra.mxu0 0.0
  %357 = vmatprep.subr.mxu0 0.0
  %358 = vmatpush1.msra.mxu0 0.0
  %359 = vmatprep.subr.mxu0 0.0
  %360 = vmatpush1.msra.mxu0 0.0
  %361 = vmatprep.subr.mxu0 0.0
  %362 = vmatpush1.msra.mxu0 0.0
  %363 = vmatprep.subr.mxu0 0.0
  %364 = vmatpush1.msra.mxu0 0.0
  %365 = vmatprep.subr.mxu0 0.0
  %366 = vmatpush1.msra.mxu0 0.0
  %367 = vmatprep.subr.mxu0 0.0
  %368 = vmatpush1.msra.mxu0 0.0
  %369 = vmatprep.subr.mxu0 0.0
  %370 = vmatpush1.msra.mxu0 0.0
  %371 = vmatprep.subr.mxu0 0.0
  %372 = vmatpush1.msra.mxu0 0.0
  %373 = vmatprep.subr.mxu0 0.0
  %374 = vmatpush1.msra.mxu0 0.0
  %375 = vmatprep.subr.mxu0 0.0
  %376 = vmatpush1.msra.mxu0 0.0
  %377 = vmatprep.subr.mxu0 0.0
  %378 = vmatpush1.msra.mxu0 0.0
  %379 = vmatprep.subr.mxu0 0.0
  %380 = vmatpush1.msra.mxu0 0.0
  %381 = vmatprep.mubr.f32.mxu0 0.0
  %v382 = vand.u32 %v35, 4294901760
  %v383 = vsub.f32 %v35, %v382
  %v384 = vand.u32 %v383, 4294901760
  %385 = vmatmul.mubr.f32.gmra.mrb[0].mxu0 %v384
  %v386 = vpop.f32.mrb[0].mxu0
  %v387 = vadd.f32 %v303, %v386
  %v388 = vpop.f32.mrb[0].mxu0
  %389 = vmatprep.mubr.f32.mxu0 0.0
  %v390 = vand.u32 %v38, 4294901760
  %v391 = vsub.f32 %v38, %v390
  %v392 = vand.u32 %v391, 4294901760
  %393 = vmatmul.mubr.f32.gmra.mrb[0].mxu0 %v392
  %v394 = vpop.f32.mrb[0].mxu0
  %v395 = vadd.f32 %v310, %v394
  %v396 = vpop.f32.mrb[0].mxu0
  %397 = vdwg.mxu0
  %398 = vmatprep.subr.mxu0 0.0
  %v399 = vand.u32 %v22, 4294901760
  %v400 = vsub.f32 %v22, %v399
  %v401 = vand.u32 %v400, 4294901760
  %402 = vmatpush1.msra.mxu0 %v401
  %403 = vmatprep.subr.mxu0 0.0
  %v404 = vand.u32 %v23, 4294901760
  %v405 = vsub.f32 %v23, %v404
  %v406 = vand.u32 %v405, 4294901760
  %407 = vmatpush1.msra.mxu0 %v406
  %408 = vmatprep.subr.mxu0 0.0
  %v409 = vand.u32 %v24, 4294901760
  %v410 = vsub.f32 %v24, %v409
  %v411 = vand.u32 %v410, 4294901760
  %412 = vmatpush1.msra.mxu0 %v411
  %413 = vmatprep.subr.mxu0 0.0
  %v414 = vand.u32 %v25, 4294901760
  %v415 = vsub.f32 %v25, %v414
  %v416 = vand.u32 %v415, 4294901760
  %417 = vmatpush1.msra.mxu0 %v416
  %418 = vmatprep.subr.mxu0 0.0
  %419 = vmatpush1.msra.mxu0 0.0
  %420 = vmatprep.subr.mxu0 0.0
  %421 = vmatpush1.msra.mxu0 0.0
  %422 = vmatprep.subr.mxu0 0.0
  %423 = vmatpush1.msra.mxu0 0.0
  %424 = vmatprep.subr.mxu0 0.0
  %425 = vmatpush1.msra.mxu0 0.0
  %426 = vmatprep.subr.mxu0 0.0
  %427 = vmatpush1.msra.mxu0 0.0
  %428 = vmatprep.subr.mxu0 0.0
  %429 = vmatpush1.msra.mxu0 0.0
  %430 = vmatprep.subr.mxu0 0.0
  %431 = vmatpush1.msra.mxu0 0.0
  %432 = vmatprep.subr.mxu0 0.0
  %433 = vmatpush1.msra.mxu0 0.0
  %434 = vmatprep.subr.mxu0 0.0
  %435 = vmatpush1.msra.mxu0 0.0
  %436 = vmatprep.subr.mxu0 0.0
  %437 = vmatpush1.msra.mxu0 0.0
  %438 = vmatprep.subr.mxu0 0.0
  %439 = vmatpush1.msra.mxu0 0.0
  %440 = vmatprep.subr.mxu0 0.0
  %441 = vmatpush1.msra.mxu0 0.0
  %442 = vmatprep.subr.mxu0 0.0
  %443 = vmatpush1.msra.mxu0 0.0
  %444 = vmatprep.subr.mxu0 0.0
  %445 = vmatpush1.msra.mxu0 0.0
  %446 = vmatprep.subr.mxu0 0.0
  %447 = vmatpush1.msra.mxu0 0.0
  %448 = vmatprep.subr.mxu0 0.0
  %449 = vmatpush1.msra.mxu0 0.0
  %450 = vmatprep.subr.mxu0 0.0
  %451 = vmatpush1.msra.mxu0 0.0
  %452 = vmatprep.subr.mxu0 0.0
  %453 = vmatpush1.msra.mxu0 0.0
  %454 = vmatprep.subr.mxu0 0.0
  %455 = vmatpush1.msra.mxu0 0.0
  %456 = vmatprep.subr.mxu0 0.0
  %457 = vmatpush1.msra.mxu0 0.0
  %458 = vmatprep.subr.mxu0 0.0
  %459 = vmatpush1.msra.mxu0 0.0
  %460 = vmatprep.subr.mxu0 0.0
  %461 = vmatpush1.msra.mxu0 0.0
  %462 = vmatprep.subr.mxu0 0.0
  %463 = vmatpush1.msra.mxu0 0.0
  %464 = vmatprep.subr.mxu0 0.0
  %465 = vmatpush1.msra.mxu0 0.0
  %466 = vmatprep.subr.mxu0 0.0
  %467 = vmatpush1.msra.mxu0 0.0
  %468 = vmatprep.subr.mxu0 0.0
  %469 = vmatpush1.msra.mxu0 0.0
  %470 = vmatprep.subr.mxu0 0.0
  %471 = vmatpush1.msra.mxu0 0.0
  %472 = vmatprep.subr.mxu0 0.0
  %473 = vmatpush1.msra.mxu0 0.0
  %474 = vmatprep.mubr.f32.mxu0 0.0
  %v475 = vand.u32 %v35, 4294901760
  %476 = vmatmul.mubr.f32.gmra.mrb[0].mxu0 %v475
  %v477 = vpop.f32.mrb[0].mxu0
  %v478 = vadd.f32 %v387, %v477
  %v479 = vpop.f32.mrb[0].mxu0
  %480 = vmatprep.mubr.f32.mxu0 0.0
  %v481 = vand.u32 %v38, 4294901760
  %482 = vmatmul.mubr.f32.gmra.mrb[0].mxu0 %v481
  %v483 = vpop.f32.mrb[0].mxu0
  %v484 = vadd.f32 %v395, %v483
  %v485 = vpop.f32.mrb[0].mxu0
  %486 = vdwg.mxu0
  %487 = vmatprep.subr.mxu0 0.0
  %v488 = vand.u32 %v22, 4294901760
  %489 = vmatpush1.msra.mxu0 %v488
  %490 = vmatprep.subr.mxu0 0.0
  %v491 = vand.u32 %v23, 4294901760
  %492 = vmatpush1.msra.mxu0 %v491
  %493 = vmatprep.subr.mxu0 0.0
  %v494 = vand.u32 %v24, 4294901760
  %495 = vmatpush1.msra.mxu0 %v494
  %496 = vmatprep.subr.mxu0 0.0
  %v497 = vand.u32 %v25, 4294901760
  %498 = vmatpush1.msra.mxu0 %v497
  %499 = vmatprep.subr.mxu0 0.0
  %500 = vmatpush1.msra.mxu0 0.0
  %501 = vmatprep.subr.mxu0 0.0
  %502 = vmatpush1.msra.mxu0 0.0
  %503 = vmatprep.subr.mxu0 0.0
  %504 = vmatpush1.msra.mxu0 0.0
  %505 = vmatprep.subr.mxu0 0.0
  %506 = vmatpush1.msra.mxu0 0.0
  %507 = vmatprep.subr.mxu0 0.0
  %508 = vmatpush1.msra.mxu0 0.0
  %509 = vmatprep.subr.mxu0 0.0
  %510 = vmatpush1.msra.mxu0 0.0
  %511 = vmatprep.subr.mxu0 0.0
  %512 = vmatpush1.msra.mxu0 0.0
  %513 = vmatprep.subr.mxu0 0.0
  %514 = vmatpush1.msra.mxu0 0.0
  %515 = vmatprep.subr.mxu0 0.0
  %516 = vmatpush1.msra.mxu0 0.0
  %517 = vmatprep.subr.mxu0 0.0
  %518 = vmatpush1.msra.mxu0 0.0
  %519 = vmatprep.subr.mxu0 0.0
  %520 = vmatpush1.msra.mxu0 0.0
  %521 = vmatprep.subr.mxu0 0.0
  %522 = vmatpush1.msra.mxu0 0.0
  %523 = vmatprep.subr.mxu0 0.0
  %524 = vmatpush1.msra.mxu0 0.0
  %525 = vmatprep.subr.mxu0 0.0
  %526 = vmatpush1.msra.mxu0 0.0
  %527 = vmatprep.subr.mxu0 0.0
  %528 = vmatpush1.msra.mxu0 0.0
  %529 = vmatprep.subr.mxu0 0.0
  %530 = vmatpush1.msra.mxu0 0.0
  %531 = vmatprep.subr.mxu0 0.0
  %532 = vmatpush1.msra.mxu0 0.0
  %533 = vmatprep.subr.mxu0 0.0
  %534 = vmatpush1.msra.mxu0 0.0
  %535 = vmatprep.subr.mxu0 0.0
  %536 = vmatpush1.msra.mxu0 0.0
  %537 = vmatprep.subr.mxu0 0.0
  %538 = vmatpush1.msra.mxu0 0.0
  %539 = vmatprep.subr.mxu0 0.0
  %540 = vmatpush1.msra.mxu0 0.0
  %541 = vmatprep.subr.mxu0 0.0
  %542 = vmatpush1.msra.mxu0 0.0
  %543 = vmatprep.subr.mxu0 0.0
  %544 = vmatpush1.msra.mxu0 0.0
  %545 = vmatprep.subr.mxu0 0.0
  %546 = vmatpush1.msra.mxu0 0.0
  %547 = vmatprep.subr.mxu0 0.0
  %548 = vmatpush1.msra.mxu0 0.0
  %549 = vmatprep.subr.mxu0 0.0
  %550 = vmatpush1.msra.mxu0 0.0
  %551 = vmatprep.subr.mxu0 0.0
  %552 = vmatpush1.msra.mxu0 0.0
  %553 = vmatprep.subr.mxu0 0.0
  %554 = vmatpush1.msra.mxu0 0.0
  %555 = vmatprep.mubr.f32.mxu0 0.0
  %v556 = vand.u32 %v35, 4294901760
  %557 = vmatmul.mubr.f32.gmra.mrb[0].mxu0 %v556
  %v558 = vpop.f32.mrb[0].mxu0
  %v559 = vadd.f32 %v478, %v558
  %v560 = vpop.f32.mrb[0].mxu0
  %561 = vmatprep.mubr.f32.mxu0 0.0
  %v562 = vand.u32 %v38, 4294901760
  %563 = vmatmul.mubr.f32.gmra.mrb[0].mxu0 %v562
  %v564 = vpop.f32.mrb[0].mxu0
  %v565 = vadd.f32 %v484, %v564
  %v566 = vpop.f32.mrb[0].mxu0
  %567 = vdwg.mxu0
  %v568 = vmax.f32 %v559, 0.0
  %v569 = vmax.f32 %v565, 0.0
  %v570 = vld [vmem:[%s3] sm:$0xff]
  %v571 = vld [vmem:[%s3 + $0x8] sm:$0xff]
  %v572 = vld [vmem:[%s3 + $0x10] sm:$0xff]
  %v573 = vld [vmem:[%s3 + $0x18] sm:$0xff]
  %v574 = vld [vmem:[%s3 + $0x20] sm:$0xff]
  %v575 = vld [vmem:[%s3 + $0x28] sm:$0xff]
  %v576 = vld [vmem:[%s3 + $0x30] sm:$0xff]
  %v577 = vld [vmem:[%s3 + $0x38] sm:$0xff]
  %vm578 = vcmask 523264
  %v580 = vsel %vm578, %v568, 0
  %v583 = vsel %vm578, %v569, 0
  %585 = vmatprep.subr.mxu0 0.0
  %v586 = vand.u32 %v570, 4294901760
  %587 = vmatpush1.msra.mxu0 %v586
  %588 = vmatprep.subr.mxu0 0.0
  %v589 = vand.u32 %v571, 4294901760
  %590 = vmatpush1.msra.mxu0 %v589
  %591 = vmatprep.subr.mxu0 0.0
  %v592 = vand.u32 %v572, 4294901760
  %593 = vmatpush1.msra.mxu0 %v592
  %594 = vmatprep.subr.mxu0 0.0
  %v595 = vand.u32 %v573, 4294901760
  %596 = vmatpush1.msra.mxu0 %v595
  %597 = vmatprep.subr.mxu0 0.0
  %v598 = vand.u32 %v574, 4294901760
  %599 = vmatpush1.msra.mxu0 %v598
  %600 = vmatprep.subr.mxu0 0.0
  %v601 = vand.u32 %v575, 4294901760
  %602 = vmatpush1.msra.mxu0 %v601
  %603 = vmatprep.subr.mxu0 0.0
  %v604 = vand.u32 %v576, 4294901760
  %605 = vmatpush1.msra.mxu0 %v604
  %606 = vmatprep.subr.mxu0 0.0
  %v607 = vand.u32 %v577, 4294901760
  %608 = vmatpush1.msra.mxu0 %v607
  %609 = vmatprep.subr.mxu0 0.0
  %610 = vmatpush1.msra.mxu0 0.0
  %611 = vmatprep.subr.mxu0 0.0
  %612 = vmatpush1.msra.mxu0 0.0
  %613 = vmatprep.subr.mxu0 0.0
  %614 = vmatpush1.msra.mxu0 0.0
  %615 = vmatprep.subr.mxu0 0.0
  %616 = vmatpush1.msra.mxu0 0.0
  %617 = vmatprep.subr.mxu0 0.0
  %618 = vmatpush1.msra.mxu0 0.0
  %619 = vmatprep.subr.mxu0 0.0
  %620 = vmatpush1.msra.mxu0 0.0
  %621 = vmatprep.subr.mxu0 0.0
  %622 = vmatpush1.msra.mxu0 0.0
  %623 = vmatprep.subr.mxu0 0.0
  %624 = vmatpush1.msra.mxu0 0.0
  %625 = vmatprep.subr.mxu0 0.0
  %626 = vmatpush1.msra.mxu0 0.0
  %627 = vmatprep.subr.mxu0 0.0
  %628 = vmatpush1.msra.mxu0 0.0
  %629 = vmatprep.subr.mxu0 0.0
  %630 = vmatpush1.msra.mxu0 0.0
  %631 = vmatprep.subr.mxu0 0.0
  %632 = vmatpush1.msra.mxu0 0.0
  %633 = vmatprep.subr.mxu0 0.0
  %634 = vmatpush1.msra.mxu0 0.0
  %635 = vmatprep.subr.mxu0 0.0
  %636 = vmatpush1.msra.mxu0 0.0
  %637 = vmatprep.subr.mxu0 0.0
  %638 = vmatpush1.msra.mxu0 0.0
  %639 = vmatprep.subr.mxu0 0.0
  %640 = vmatpush1.msra.mxu0 0.0
  %641 = vmatprep.subr.mxu0 0.0
  %642 = vmatpush1.msra.mxu0 0.0
  %643 = vmatprep.subr.mxu0 0.0
  %644 = vmatpush1.msra.mxu0 0.0
  %645 = vmatprep.subr.mxu0 0.0
  %646 = vmatpush1.msra.mxu0 0.0
  %647 = vmatprep.subr.mxu0 0.0
  %648 = vmatpush1.msra.mxu0 0.0
  %649 = vmatprep.subr.mxu0 0.0
  %650 = vmatpush1.msra.mxu0 0.0
  %651 = vmatprep.subr.mxu0 0.0
  %652 = vmatpush1.msra.mxu0 0.0
  %653 = vmatprep.subr.mxu0 0.0
  %654 = vmatpush1.msra.mxu0 0.0
  %655 = vmatprep.subr.mxu0 0.0
  %656 = vmatpush1.msra.mxu0 0.0
  %657 = vmatprep.mubr.f32.mxu0 0.0
  %v658 = vand.u32 %v580, 4294901760
  %v659 = vsub.f32 %v580, %v658
  %v660 = vand.u32 %v659, 4294901760
  %v661 = vsub.f32 %v659, %v660
  %v662 = vand.u32 %v661, 4294901760
  %663 = vmatmul.mubr.f32.gmra.mrb[0].mxu0 %v662
  %v664 = vpop.f32.mrb[0].mxu0
  %v665 = vadd.f32 0.0, %v664
  %v666 = vpop.f32.mrb[0].mxu0
  %667 = vmatprep.mubr.f32.mxu0 0.0
  %v668 = vand.u32 %v583, 4294901760
  %v669 = vsub.f32 %v583, %v668
  %v670 = vand.u32 %v669, 4294901760
  %v671 = vsub.f32 %v669, %v670
  %v672 = vand.u32 %v671, 4294901760
  %673 = vmatmul.mubr.f32.gmra.mrb[0].mxu0 %v672
  %v674 = vpop.f32.mrb[0].mxu0
  %v675 = vadd.f32 0.0, %v674
  %v676 = vpop.f32.mrb[0].mxu0
  %677 = vdwg.mxu0
  %678 = vmatprep.subr.mxu0 0.0
  %v679 = vand.u32 %v570, 4294901760
  %v680 = vsub.f32 %v570, %v679
  %v681 = vand.u32 %v680, 4294901760
  %v682 = vsub.f32 %v680, %v681
  %v683 = vand.u32 %v682, 4294901760
  %684 = vmatpush1.msra.mxu0 %v683
  %685 = vmatprep.subr.mxu0 0.0
  %v686 = vand.u32 %v571, 4294901760
  %v687 = vsub.f32 %v571, %v686
  %v688 = vand.u32 %v687, 4294901760
  %v689 = vsub.f32 %v687, %v688
  %v690 = vand.u32 %v689, 4294901760
  %691 = vmatpush1.msra.mxu0 %v690
  %692 = vmatprep.subr.mxu0 0.0
  %v693 = vand.u32 %v572, 4294901760
  %v694 = vsub.f32 %v572, %v693
  %v695 = vand.u32 %v694, 4294901760
  %v696 = vsub.f32 %v694, %v695
  %v697 = vand.u32 %v696, 4294901760
  %698 = vmatpush1.msra.mxu0 %v697
  %699 = vmatprep.subr.mxu0 0.0
  %v700 = vand.u32 %v573, 4294901760
  %v701 = vsub.f32 %v573, %v700
  %v702 = vand.u32 %v701, 4294901760
  %v703 = vsub.f32 %v701, %v702
  %v704 = vand.u32 %v703, 4294901760
  %705 = vmatpush1.msra.mxu0 %v704
  %706 = vmatprep.subr.mxu0 0.0
  %v707 = vand.u32 %v574, 4294901760
  %v708 = vsub.f32 %v574, %v707
  %v709 = vand.u32 %v708, 4294901760
  %v710 = vsub.f32 %v708, %v709
  %v711 = vand.u32 %v710, 4294901760
  %712 = vmatpush1.msra.mxu0 %v711
  %713 = vmatprep.subr.mxu0 0.0
  %v714 = vand.u32 %v575, 4294901760
  %v715 = vsub.f32 %v575, %v714
  %v716 = vand.u32 %v715, 4294901760
  %v717 = vsub.f32 %v715, %v716
  %v718 = vand.u32 %v717, 4294901760
  %719 = vmatpush1.msra.mxu0 %v718
  %720 = vmatprep.subr.mxu0 0.0
  %v721 = vand.u32 %v576, 4294901760
  %v722 = vsub.f32 %v576, %v721
  %v723 = vand.u32 %v722, 4294901760
  %v724 = vsub.f32 %v722, %v723
  %v725 = vand.u32 %v724, 4294901760
  %726 = vmatpush1.msra.mxu0 %v725
  %727 = vmatprep.subr.mxu0 0.0
  %v728 = vand.u32 %v577, 4294901760
  %v729 = vsub.f32 %v577, %v728
  %v730 = vand.u32 %v729, 4294901760
  %v731 = vsub.f32 %v729, %v730
  %v732 = vand.u32 %v731, 4294901760
  %733 = vmatpush1.msra.mxu0 %v732
  %734 = vmatprep.subr.mxu0 0.0
  %735 = vmatpush1.msra.mxu0 0.0
  %736 = vmatprep.subr.mxu0 0.0
  %737 = vmatpush1.msra.mxu0 0.0
  %738 = vmatprep.subr.mxu0 0.0
  %739 = vmatpush1.msra.mxu0 0.0
  %740 = vmatprep.subr.mxu0 0.0
  %741 = vmatpush1.msra.mxu0 0.0
  %742 = vmatprep.subr.mxu0 0.0
  %743 = vmatpush1.msra.mxu0 0.0
  %744 = vmatprep.subr.mxu0 0.0
  %745 = vmatpush1.msra.mxu0 0.0
  %746 = vmatprep.subr.mxu0 0.0
  %747 = vmatpush1.msra.mxu0 0.0
  %748 = vmatprep.subr.mxu0 0.0
  %749 = vmatpush1.msra.mxu0 0.0
  %750 = vmatprep.subr.mxu0 0.0
  %751 = vmatpush1.msra.mxu0 0.0
  %752 = vmatprep.subr.mxu0 0.0
  %753 = vmatpush1.msra.mxu0 0.0
  %754 = vmatprep.subr.mxu0 0.0
  %755 = vmatpush1.msra.mxu0 0.0
  %756 = vmatprep.subr.mxu0 0.0
  %757 = vmatpush1.msra.mxu0 0.0
  %758 = vmatprep.subr.mxu0 0.0
  %759 = vmatpush1.msra.mxu0 0.0
  %760 = vmatprep.subr.mxu0 0.0
  %761 = vmatpush1.msra.mxu0 0.0
  %762 = vmatprep.subr.mxu0 0.0
  %763 = vmatpush1.msra.mxu0 0.0
  %764 = vmatprep.subr.mxu0 0.0
  %765 = vmatpush1.msra.mxu0 0.0
  %766 = vmatprep.subr.mxu0 0.0
  %767 = vmatpush1.msra.mxu0 0.0
  %768 = vmatprep.subr.mxu0 0.0
  %769 = vmatpush1.msra.mxu0 0.0
  %770 = vmatprep.subr.mxu0 0.0
  %771 = vmatpush1.msra.mxu0 0.0
  %772 = vmatprep.subr.mxu0 0.0
  %773 = vmatpush1.msra.mxu0 0.0
  %774 = vmatprep.subr.mxu0 0.0
  %775 = vmatpush1.msra.mxu0 0.0
  %776 = vmatprep.subr.mxu0 0.0
  %777 = vmatpush1.msra.mxu0 0.0
  %778 = vmatprep.subr.mxu0 0.0
  %779 = vmatpush1.msra.mxu0 0.0
  %780 = vmatprep.subr.mxu0 0.0
  %781 = vmatpush1.msra.mxu0 0.0
  %782 = vmatprep.mubr.f32.mxu0 0.0
  %v783 = vand.u32 %v580, 4294901760
  %784 = vmatmul.mubr.f32.gmra.mrb[0].mxu0 %v783
  %v785 = vpop.f32.mrb[0].mxu0
  %v786 = vadd.f32 %v665, %v785
  %v787 = vpop.f32.mrb[0].mxu0
  %788 = vmatprep.mubr.f32.mxu0 0.0
  %v789 = vand.u32 %v583, 4294901760
  %790 = vmatmul.mubr.f32.gmra.mrb[0].mxu0 %v789
  %v791 = vpop.f32.mrb[0].mxu0
  %v792 = vadd.f32 %v675, %v791
  %v793 = vpop.f32.mrb[0].mxu0
  %794 = vdwg.mxu0
  %795 = vmatprep.subr.mxu0 0.0
  %v796 = vand.u32 %v570, 4294901760
  %v797 = vsub.f32 %v570, %v796
  %798 = vmatpush1.msra.mxu0 %v797
  %799 = vmatprep.subr.mxu0 0.0
  %v800 = vand.u32 %v571, 4294901760
  %v801 = vsub.f32 %v571, %v800
  %802 = vmatpush1.msra.mxu0 %v801
  %803 = vmatprep.subr.mxu0 0.0
  %v804 = vand.u32 %v572, 4294901760
  %v805 = vsub.f32 %v572, %v804
  %806 = vmatpush1.msra.mxu0 %v805
  %807 = vmatprep.subr.mxu0 0.0
  %v808 = vand.u32 %v573, 4294901760
  %v809 = vsub.f32 %v573, %v808
  %810 = vmatpush1.msra.mxu0 %v809
  %811 = vmatprep.subr.mxu0 0.0
  %v812 = vand.u32 %v574, 4294901760
  %v813 = vsub.f32 %v574, %v812
  %814 = vmatpush1.msra.mxu0 %v813
  %815 = vmatprep.subr.mxu0 0.0
  %v816 = vand.u32 %v575, 4294901760
  %v817 = vsub.f32 %v575, %v816
  %818 = vmatpush1.msra.mxu0 %v817
  %819 = vmatprep.subr.mxu0 0.0
  %v820 = vand.u32 %v576, 4294901760
  %v821 = vsub.f32 %v576, %v820
  %822 = vmatpush1.msra.mxu0 %v821
  %823 = vmatprep.subr.mxu0 0.0
  %v824 = vand.u32 %v577, 4294901760
  %v825 = vsub.f32 %v577, %v824
  %826 = vmatpush1.msra.mxu0 %v825
  %827 = vmatprep.subr.mxu0 0.0
  %828 = vmatpush1.msra.mxu0 0.0
  %829 = vmatprep.subr.mxu0 0.0
  %830 = vmatpush1.msra.mxu0 0.0
  %831 = vmatprep.subr.mxu0 0.0
  %832 = vmatpush1.msra.mxu0 0.0
  %833 = vmatprep.subr.mxu0 0.0
  %834 = vmatpush1.msra.mxu0 0.0
  %835 = vmatprep.subr.mxu0 0.0
  %836 = vmatpush1.msra.mxu0 0.0
  %837 = vmatprep.subr.mxu0 0.0
  %838 = vmatpush1.msra.mxu0 0.0
  %839 = vmatprep.subr.mxu0 0.0
  %840 = vmatpush1.msra.mxu0 0.0
  %841 = vmatprep.subr.mxu0 0.0
  %842 = vmatpush1.msra.mxu0 0.0
  %843 = vmatprep.subr.mxu0 0.0
  %844 = vmatpush1.msra.mxu0 0.0
  %845 = vmatprep.subr.mxu0 0.0
  %846 = vmatpush1.msra.mxu0 0.0
  %847 = vmatprep.subr.mxu0 0.0
  %848 = vmatpush1.msra.mxu0 0.0
  %849 = vmatprep.subr.mxu0 0.0
  %850 = vmatpush1.msra.mxu0 0.0
  %851 = vmatprep.subr.mxu0 0.0
  %852 = vmatpush1.msra.mxu0 0.0
  %853 = vmatprep.subr.mxu0 0.0
  %854 = vmatpush1.msra.mxu0 0.0
  %855 = vmatprep.subr.mxu0 0.0
  %856 = vmatpush1.msra.mxu0 0.0
  %857 = vmatprep.subr.mxu0 0.0
  %858 = vmatpush1.msra.mxu0 0.0
  %859 = vmatprep.subr.mxu0 0.0
  %860 = vmatpush1.msra.mxu0 0.0
  %861 = vmatprep.subr.mxu0 0.0
  %862 = vmatpush1.msra.mxu0 0.0
  %863 = vmatprep.subr.mxu0 0.0
  %864 = vmatpush1.msra.mxu0 0.0
  %865 = vmatprep.subr.mxu0 0.0
  %866 = vmatpush1.msra.mxu0 0.0
  %867 = vmatprep.subr.mxu0 0.0
  %868 = vmatpush1.msra.mxu0 0.0
  %869 = vmatprep.subr.mxu0 0.0
  %870 = vmatpush1.msra.mxu0 0.0
  %871 = vmatprep.subr.mxu0 0.0
  %872 = vmatpush1.msra.mxu0 0.0
  %873 = vmatprep.subr.mxu0 0.0
  %874 = vmatpush1.msra.mxu0 0.0
  %875 = vmatprep.mubr.f32.mxu0 0.0
  %v876 = vand.u32 %v580, 4294901760
  %v877 = vsub.f32 %v580, %v876
  %878 = vmatmul.mubr.f32.gmra.mrb[0].mxu0 %v877
  %v879 = vpop.f32.mrb[0].mxu0
  %v880 = vadd.f32 %v786, %v879
  %v881 = vpop.f32.mrb[0].mxu0
  %882 = vmatprep.mubr.f32.mxu0 0.0
  %v883 = vand.u32 %v583, 4294901760
  %v884 = vsub.f32 %v583, %v883
  %885 = vmatmul.mubr.f32.gmra.mrb[0].mxu0 %v884
  %v886 = vpop.f32.mrb[0].mxu0
  %v887 = vadd.f32 %v792, %v886
  %v888 = vpop.f32.mrb[0].mxu0
  %889 = vdwg.mxu0
  %890 = vmatprep.subr.mxu0 0.0
  %v891 = vand.u32 %v570, 4294901760
  %892 = vmatpush1.msra.mxu0 %v891
  %893 = vmatprep.subr.mxu0 0.0
  %v894 = vand.u32 %v571, 4294901760
  %895 = vmatpush1.msra.mxu0 %v894
  %896 = vmatprep.subr.mxu0 0.0
  %v897 = vand.u32 %v572, 4294901760
  %898 = vmatpush1.msra.mxu0 %v897
  %899 = vmatprep.subr.mxu0 0.0
  %v900 = vand.u32 %v573, 4294901760
  %901 = vmatpush1.msra.mxu0 %v900
  %902 = vmatprep.subr.mxu0 0.0
  %v903 = vand.u32 %v574, 4294901760
  %904 = vmatpush1.msra.mxu0 %v903
  %905 = vmatprep.subr.mxu0 0.0
  %v906 = vand.u32 %v575, 4294901760
  %907 = vmatpush1.msra.mxu0 %v906
  %908 = vmatprep.subr.mxu0 0.0
  %v909 = vand.u32 %v576, 4294901760
  %910 = vmatpush1.msra.mxu0 %v909
  %911 = vmatprep.subr.mxu0 0.0
  %v912 = vand.u32 %v577, 4294901760
  %913 = vmatpush1.msra.mxu0 %v912
  %914 = vmatprep.subr.mxu0 0.0
  %915 = vmatpush1.msra.mxu0 0.0
  %916 = vmatprep.subr.mxu0 0.0
  %917 = vmatpush1.msra.mxu0 0.0
  %918 = vmatprep.subr.mxu0 0.0
  %919 = vmatpush1.msra.mxu0 0.0
  %920 = vmatprep.subr.mxu0 0.0
  %921 = vmatpush1.msra.mxu0 0.0
  %922 = vmatprep.subr.mxu0 0.0
  %923 = vmatpush1.msra.mxu0 0.0
  %924 = vmatprep.subr.mxu0 0.0
  %925 = vmatpush1.msra.mxu0 0.0
  %926 = vmatprep.subr.mxu0 0.0
  %927 = vmatpush1.msra.mxu0 0.0
  %928 = vmatprep.subr.mxu0 0.0
  %929 = vmatpush1.msra.mxu0 0.0
  %930 = vmatprep.subr.mxu0 0.0
  %931 = vmatpush1.msra.mxu0 0.0
  %932 = vmatprep.subr.mxu0 0.0
  %933 = vmatpush1.msra.mxu0 0.0
  %934 = vmatprep.subr.mxu0 0.0
  %935 = vmatpush1.msra.mxu0 0.0
  %936 = vmatprep.subr.mxu0 0.0
  %937 = vmatpush1.msra.mxu0 0.0
  %938 = vmatprep.subr.mxu0 0.0
  %939 = vmatpush1.msra.mxu0 0.0
  %940 = vmatprep.subr.mxu0 0.0
  %941 = vmatpush1.msra.mxu0 0.0
  %942 = vmatprep.subr.mxu0 0.0
  %943 = vmatpush1.msra.mxu0 0.0
  %944 = vmatprep.subr.mxu0 0.0
  %945 = vmatpush1.msra.mxu0 0.0
  %946 = vmatprep.subr.mxu0 0.0
  %947 = vmatpush1.msra.mxu0 0.0
  %948 = vmatprep.subr.mxu0 0.0
  %949 = vmatpush1.msra.mxu0 0.0
  %950 = vmatprep.subr.mxu0 0.0
  %951 = vmatpush1.msra.mxu0 0.0
  %952 = vmatprep.subr.mxu0 0.0
  %953 = vmatpush1.msra.mxu0 0.0
  %954 = vmatprep.subr.mxu0 0.0
  %955 = vmatpush1.msra.mxu0 0.0
  %956 = vmatprep.subr.mxu0 0.0
  %957 = vmatpush1.msra.mxu0 0.0
  %958 = vmatprep.subr.mxu0 0.0
  %959 = vmatpush1.msra.mxu0 0.0
  %960 = vmatprep.subr.mxu0 0.0
  %961 = vmatpush1.msra.mxu0 0.0
  %962 = vmatprep.mubr.f32.mxu0 0.0
  %v963 = vand.u32 %v580, 4294901760
  %v964 = vsub.f32 %v580, %v963
  %v965 = vand.u32 %v964, 4294901760
  %966 = vmatmul.mubr.f32.gmra.mrb[0].mxu0 %v965
  %v967 = vpop.f32.mrb[0].mxu0
  %v968 = vadd.f32 %v880, %v967
  %v969 = vpop.f32.mrb[0].mxu0
  %970 = vmatprep.mubr.f32.mxu0 0.0
  %v971 = vand.u32 %v583, 4294901760
  %v972 = vsub.f32 %v583, %v971
  %v973 = vand.u32 %v972, 4294901760
  %974 = vmatmul.mubr.f32.gmra.mrb[0].mxu0 %v973
  %v975 = vpop.f32.mrb[0].mxu0
  %v976 = vadd.f32 %v887, %v975
  %v977 = vpop.f32.mrb[0].mxu0
  %978 = vdwg.mxu0
  %979 = vmatprep.subr.mxu0 0.0
  %v980 = vand.u32 %v570, 4294901760
  %v981 = vsub.f32 %v570, %v980
  %v982 = vand.u32 %v981, 4294901760
  %983 = vmatpush1.msra.mxu0 %v982
  %984 = vmatprep.subr.mxu0 0.0
  %v985 = vand.u32 %v571, 4294901760
  %v986 = vsub.f32 %v571, %v985
  %v987 = vand.u32 %v986, 4294901760
  %988 = vmatpush1.msra.mxu0 %v987
  %989 = vmatprep.subr.mxu0 0.0
  %v990 = vand.u32 %v572, 4294901760
  %v991 = vsub.f32 %v572, %v990
  %v992 = vand.u32 %v991, 4294901760
  %993 = vmatpush1.msra.mxu0 %v992
  %994 = vmatprep.subr.mxu0 0.0
  %v995 = vand.u32 %v573, 4294901760
  %v996 = vsub.f32 %v573, %v995
  %v997 = vand.u32 %v996, 4294901760
  %998 = vmatpush1.msra.mxu0 %v997
  %999 = vmatprep.subr.mxu0 0.0
  %v1000 = vand.u32 %v574, 4294901760
  %v1001 = vsub.f32 %v574, %v1000
  %v1002 = vand.u32 %v1001, 4294901760
  %1003 = vmatpush1.msra.mxu0 %v1002
  %1004 = vmatprep.subr.mxu0 0.0
  %v1005 = vand.u32 %v575, 4294901760
  %v1006 = vsub.f32 %v575, %v1005
  %v1007 = vand.u32 %v1006, 4294901760
  %1008 = vmatpush1.msra.mxu0 %v1007
  %1009 = vmatprep.subr.mxu0 0.0
  %v1010 = vand.u32 %v576, 4294901760
  %v1011 = vsub.f32 %v576, %v1010
  %v1012 = vand.u32 %v1011, 4294901760
  %1013 = vmatpush1.msra.mxu0 %v1012
  %1014 = vmatprep.subr.mxu0 0.0
  %v1015 = vand.u32 %v577, 4294901760
  %v1016 = vsub.f32 %v577, %v1015
  %v1017 = vand.u32 %v1016, 4294901760
  %1018 = vmatpush1.msra.mxu0 %v1017
  %1019 = vmatprep.subr.mxu0 0.0
  %1020 = vmatpush1.msra.mxu0 0.0
  %1021 = vmatprep.subr.mxu0 0.0
  %1022 = vmatpush1.msra.mxu0 0.0
  %1023 = vmatprep.subr.mxu0 0.0
  %1024 = vmatpush1.msra.mxu0 0.0
  %1025 = vmatprep.subr.mxu0 0.0
  %1026 = vmatpush1.msra.mxu0 0.0
  %1027 = vmatprep.subr.mxu0 0.0
  %1028 = vmatpush1.msra.mxu0 0.0
  %1029 = vmatprep.subr.mxu0 0.0
  %1030 = vmatpush1.msra.mxu0 0.0
  %1031 = vmatprep.subr.mxu0 0.0
  %1032 = vmatpush1.msra.mxu0 0.0
  %1033 = vmatprep.subr.mxu0 0.0
  %1034 = vmatpush1.msra.mxu0 0.0
  %1035 = vmatprep.subr.mxu0 0.0
  %1036 = vmatpush1.msra.mxu0 0.0
  %1037 = vmatprep.subr.mxu0 0.0
  %1038 = vmatpush1.msra.mxu0 0.0
  %1039 = vmatprep.subr.mxu0 0.0
  %1040 = vmatpush1.msra.mxu0 0.0
  %1041 = vmatprep.subr.mxu0 0.0
  %1042 = vmatpush1.msra.mxu0 0.0
  %1043 = vmatprep.subr.mxu0 0.0
  %1044 = vmatpush1.msra.mxu0 0.0
  %1045 = vmatprep.subr.mxu0 0.0
  %1046 = vmatpush1.msra.mxu0 0.0
  %1047 = vmatprep.subr.mxu0 0.0
  %1048 = vmatpush1.msra.mxu0 0.0
  %1049 = vmatprep.subr.mxu0 0.0
  %1050 = vmatpush1.msra.mxu0 0.0
  %1051 = vmatprep.subr.mxu0 0.0
  %1052 = vmatpush1.msra.mxu0 0.0
  %1053 = vmatprep.subr.mxu0 0.0
  %1054 = vmatpush1.msra.mxu0 0.0
  %1055 = vmatprep.subr.mxu0 0.0
  %1056 = vmatpush1.msra.mxu0 0.0
  %1057 = vmatprep.subr.mxu0 0.0
  %1058 = vmatpush1.msra.mxu0 0.0
  %1059 = vmatprep.subr.mxu0 0.0
  %1060 = vmatpush1.msra.mxu0 0.0
  %1061 = vmatprep.subr.mxu0 0.0
  %1062 = vmatpush1.msra.mxu0 0.0
  %1063 = vmatprep.subr.mxu0 0.0
  %1064 = vmatpush1.msra.mxu0 0.0
  %1065 = vmatprep.subr.mxu0 0.0
  %1066 = vmatpush1.msra.mxu0 0.0
  %1067 = vmatprep.mubr.f32.mxu0 0.0
  %v1068 = vand.u32 %v580, 4294901760
  %1069 = vmatmul.mubr.f32.gmra.mrb[0].mxu0 %v1068
  %v1070 = vpop.f32.mrb[0].mxu0
  %v1071 = vadd.f32 %v968, %v1070
  %v1072 = vpop.f32.mrb[0].mxu0
  %1073 = vmatprep.mubr.f32.mxu0 0.0
  %v1074 = vand.u32 %v583, 4294901760
  %1075 = vmatmul.mubr.f32.gmra.mrb[0].mxu0 %v1074
  %v1076 = vpop.f32.mrb[0].mxu0
  %v1077 = vadd.f32 %v976, %v1076
  %v1078 = vpop.f32.mrb[0].mxu0
  %1079 = vdwg.mxu0
  %1080 = vmatprep.subr.mxu0 0.0
  %v1081 = vand.u32 %v570, 4294901760
  %1082 = vmatpush1.msra.mxu0 %v1081
  %1083 = vmatprep.subr.mxu0 0.0
  %v1084 = vand.u32 %v571, 4294901760
  %1085 = vmatpush1.msra.mxu0 %v1084
  %1086 = vmatprep.subr.mxu0 0.0
  %v1087 = vand.u32 %v572, 4294901760
  %1088 = vmatpush1.msra.mxu0 %v1087
  %1089 = vmatprep.subr.mxu0 0.0
  %v1090 = vand.u32 %v573, 4294901760
  %1091 = vmatpush1.msra.mxu0 %v1090
  %1092 = vmatprep.subr.mxu0 0.0
  %v1093 = vand.u32 %v574, 4294901760
  %1094 = vmatpush1.msra.mxu0 %v1093
  %1095 = vmatprep.subr.mxu0 0.0
  %v1096 = vand.u32 %v575, 4294901760
  %1097 = vmatpush1.msra.mxu0 %v1096
  %1098 = vmatprep.subr.mxu0 0.0
  %v1099 = vand.u32 %v576, 4294901760
  %1100 = vmatpush1.msra.mxu0 %v1099
  %1101 = vmatprep.subr.mxu0 0.0
  %v1102 = vand.u32 %v577, 4294901760
  %1103 = vmatpush1.msra.mxu0 %v1102
  %1104 = vmatprep.subr.mxu0 0.0
  %1105 = vmatpush1.msra.mxu0 0.0
  %1106 = vmatprep.subr.mxu0 0.0
  %1107 = vmatpush1.msra.mxu0 0.0
  %1108 = vmatprep.subr.mxu0 0.0
  %1109 = vmatpush1.msra.mxu0 0.0
  %1110 = vmatprep.subr.mxu0 0.0
  %1111 = vmatpush1.msra.mxu0 0.0
  %1112 = vmatprep.subr.mxu0 0.0
  %1113 = vmatpush1.msra.mxu0 0.0
  %1114 = vmatprep.subr.mxu0 0.0
  %1115 = vmatpush1.msra.mxu0 0.0
  %1116 = vmatprep.subr.mxu0 0.0
  %1117 = vmatpush1.msra.mxu0 0.0
  %1118 = vmatprep.subr.mxu0 0.0
  %1119 = vmatpush1.msra.mxu0 0.0
  %1120 = vmatprep.subr.mxu0 0.0
  %1121 = vmatpush1.msra.mxu0 0.0
  %1122 = vmatprep.subr.mxu0 0.0
  %1123 = vmatpush1.msra.mxu0 0.0
  %1124 = vmatprep.subr.mxu0 0.0
  %1125 = vmatpush1.msra.mxu0 0.0
  %1126 = vmatprep.subr.mxu0 0.0
  %1127 = vmatpush1.msra.mxu0 0.0
  %1128 = vmatprep.subr.mxu0 0.0
  %1129 = vmatpush1.msra.mxu0 0.0
  %1130 = vmatprep.subr.mxu0 0.0
  %1131 = vmatpush1.msra.mxu0 0.0
  %1132 = vmatprep.subr.mxu0 0.0
  %1133 = vmatpush1.msra.mxu0 0.0
  %1134 = vmatprep.subr.mxu0 0.0
  %1135 = vmatpush1.msra.mxu0 0.0
  %1136 = vmatprep.subr.mxu0 0.0
  %1137 = vmatpush1.msra.mxu0 0.0
  %1138 = vmatprep.subr.mxu0 0.0
  %1139 = vmatpush1.msra.mxu0 0.0
  %1140 = vmatprep.subr.mxu0 0.0
  %1141 = vmatpush1.msra.mxu0 0.0
  %1142 = vmatprep.subr.mxu0 0.0
  %1143 = vmatpush1.msra.mxu0 0.0
  %1144 = vmatprep.subr.mxu0 0.0
  %1145 = vmatpush1.msra.mxu0 0.0
  %1146 = vmatprep.subr.mxu0 0.0
  %1147 = vmatpush1.msra.mxu0 0.0
  %1148 = vmatprep.subr.mxu0 0.0
  %1149 = vmatpush1.msra.mxu0 0.0
  %1150 = vmatprep.subr.mxu0 0.0
  %1151 = vmatpush1.msra.mxu0 0.0
  %1152 = vmatprep.mubr.f32.mxu0 0.0
  %v1153 = vand.u32 %v580, 4294901760
  %1154 = vmatmul.mubr.f32.gmra.mrb[0].mxu0 %v1153
  %v1155 = vpop.f32.mrb[0].mxu0
  %v1156 = vadd.f32 %v1071, %v1155
  %v1157 = vpop.f32.mrb[0].mxu0
  %1158 = vmatprep.mubr.f32.mxu0 0.0
  %v1159 = vand.u32 %v583, 4294901760
  %1160 = vmatmul.mubr.f32.gmra.mrb[0].mxu0 %v1159
  %v1161 = vpop.f32.mrb[0].mxu0
  %v1162 = vadd.f32 %v1077, %v1161
  %v1163 = vpop.f32.mrb[0].mxu0
  %1164 = vdwg.mxu0
  %v1165 = vlaneseq
  %v1166 = vshrl.u32 %v1165, 7
  %v1167 = vadd.s32 %v1166, 8
  %vm1168 = vcmp.lt.s32.totalorder %v1166, 0
  %v1169 = vsub.s32 0, %v1166
  %v1170 = vsel %vm1168, %v1169, %v1166
  %v1171 = vshrl.u32 %v1170, 3
  %v1172 = vand.u32 %v1170, 7
  %v1173 = vsub.s32 0, %v1172
  %v1174 = vsel %vm1168, %v1173, %v1172
  %vm1175 = vcmp.lt.s32.totalorder %v1167, 0
  %v1176 = vsub.s32 0, %v1167
  %v1177 = vsel %vm1175, %v1176, %v1167
  %v1178 = vshrl.u32 %v1177, 3
  %v1179 = vand.u32 %v1177, 7
  %v1180 = vsub.s32 0, %v1179
  %v1181 = vsel %vm1175, %v1180, %v1179
  %vm1182 = vcmp.ne.s32.totalorder %v1174, 0
  %vm1183 = vcmp.ne.s32.totalorder %v1181, 0
  %vm1184 = vcmp.lt.s32.totalorder %v1174, 0
  %vm1185 = vcmp.lt.s32.totalorder %v1181, 0
  %vm1186 = vmand %vm1184, %vm1182
  %vm1187 = vmand %vm1185, %vm1183
  %v1188 = vadd.s32 %v1174, 8
  %v1189 = vadd.s32 %v1181, 8
  %v1190 = vsel %vm1186, %v1188, %v1174
  %v1191 = vsel %vm1187, %v1189, %v1181
  %v1192 = vld [vmem:[%s4] sm:$0x1]
  %v1194 = vlaneseq
  %v1195 = vshrl.u32 %v1194, 7
  %v1196 = vsub.s32 0, %v1195
  %v1197 = vrot.slane %v1192, %v1196
  %v1199 = vadd.f32 %v1156, %v1197
  %v1200 = vadd.f32 %v1162, %v1197
  %v1201 = vrot.slane %v1156, 6
  %v1202 = vrot.slane %v1162, 6
  %vm1203 = vcmp.lt.s32.totalorder %v1166, 2
  %v1204 = vsel %vm1203, %v1201, %v1202
  %v1205 = vsel %vm1203, %v1202, %v1201
  %v1206 = vadd.s32 %v1190, 4294967294
  %v1207 = vadd.s32 %v1191, 4294967294
  %vm1208 = vcmp.ge.s32.totalorder %v1206, 0
  %vm1209 = vcmp.ge.s32.totalorder %v1207, 0
  %vm1210 = vcmp.lt.s32.totalorder %v1206, 8
  %vm1211 = vcmp.lt.s32.totalorder %v1207, 8
  %vm1212 = vmand %vm1208, %vm1210
  %vm1213 = vmand %vm1209, %vm1211
  %v1214 = vsel %vm1212, %v1205, 0.0
  %v1215 = vsel %vm1213, %v1204, 0.0
  %v1216 = vadd.f32 %v1199, %v1214
  %v1217 = vadd.f32 %v1200, %v1215
  %v1218 = vrot.slane %v1156, 7
  %v1219 = vrot.slane %v1162, 7
  %vm1220 = vcmp.lt.s32.totalorder %v1166, 1
  %v1221 = vsel %vm1220, %v1218, %v1219
  %v1222 = vsel %vm1220, %v1219, %v1218
  %v1223 = vadd.s32 %v1190, 4294967295
  %v1224 = vadd.s32 %v1191, 4294967295
  %vm1225 = vcmp.ge.s32.totalorder %v1223, 0
  %vm1226 = vcmp.ge.s32.totalorder %v1224, 0
  %vm1227 = vcmp.lt.s32.totalorder %v1223, 8
  %vm1228 = vcmp.lt.s32.totalorder %v1224, 8
  %vm1229 = vmand %vm1225, %vm1227
  %vm1230 = vmand %vm1226, %vm1228
  %v1231 = vsel %vm1229, %v1222, 0.0
  %v1232 = vsel %vm1230, %v1221, 0.0
  %v1233 = vadd.f32 %v1216, %v1231
  %v1234 = vadd.f32 %v1217, %v1232
  %v1235 = vrot.slane %v1156, 1
  %v1236 = vrot.slane %v1162, 1
  %vm1237 = vcmp.lt.s32.totalorder %v1166, 7
  %v1238 = vsel %vm1237, %v1235, %v1236
  %v1239 = vsel %vm1237, %v1236, %v1235
  %v1240 = vadd.s32 %v1190, 1
  %v1241 = vadd.s32 %v1191, 1
  %vm1242 = vcmp.ge.s32.totalorder %v1240, 0
  %vm1243 = vcmp.ge.s32.totalorder %v1241, 0
  %vm1244 = vcmp.lt.s32.totalorder %v1240, 8
  %vm1245 = vcmp.lt.s32.totalorder %v1241, 8
  %vm1246 = vmand %vm1242, %vm1244
  %vm1247 = vmand %vm1243, %vm1245
  %v1248 = vsel %vm1246, %v1238, 0.0
  %v1249 = vsel %vm1247, %v1239, 0.0
  %v1250 = vadd.f32 %v1233, %v1248
  %v1251 = vadd.f32 %v1234, %v1249
  %v1252 = vrot.slane %v1156, 2
  %v1253 = vrot.slane %v1162, 2
  %vm1254 = vcmp.lt.s32.totalorder %v1166, 6
  %v1255 = vsel %vm1254, %v1252, %v1253
  %v1256 = vsel %vm1254, %v1253, %v1252
  %v1257 = vadd.s32 %v1190, 2
  %v1258 = vadd.s32 %v1191, 2
  %vm1259 = vcmp.ge.s32.totalorder %v1257, 0
  %vm1260 = vcmp.ge.s32.totalorder %v1258, 0
  %vm1261 = vcmp.lt.s32.totalorder %v1257, 8
  %vm1262 = vcmp.lt.s32.totalorder %v1258, 8
  %vm1263 = vmand %vm1259, %vm1261
  %vm1264 = vmand %vm1260, %vm1262
  %v1265 = vsel %vm1263, %v1255, 0.0
  %v1266 = vsel %vm1264, %v1256, 0.0
  %v1267 = vadd.f32 %v1250, %v1265
  %v1268 = vadd.f32 %v1251, %v1266
  %1269 = vst [vmem:[%s5] sm:$0xff] %v1267
  %1270 = vst [vmem:[%s5 + $0x8] sm:$0xff] %v1268
  // Predicated region
  $region22: #{ex_lrest_self_atten.1} parent=0 // pred_check
    _
  $region23: #{ex_lrest_self_atten.1} parent=0 // pred_check_branch
    %1272 = sbr.rel (0) target = $region25
  $region24: #{ex_lrest_self_atten.1} parent=0 // pred_region
    _
  $region25: #{ex_lrest_self_atten.1} parent=0 // pred_fallthru
    _
  // Predicated region
  $region26: #{ex_lrest_self_atten.1} parent=0 // pred_check
    _
  $region27: #{ex_lrest_self_atten.1} parent=0 // pred_check_branch
    %1274 = sbr.rel (0) target = $region29
  $region28: #{ex_lrest_self_atten.1} parent=0 // pred_region
    _
  $region29: #{ex_lrest_self_atten.1} parent=0 // pred_fallthru
    _

</llo_original>
